<compile_context>
chip_gen: v5e
topology: v5e:2x2
jax: 0.10.0
libtpu: 0.0.40
codegen_flags: <defaults>
</compile_context>

<pallas_src>
import functools

import jax
import jax.numpy as jnp
from jax.experimental import pallas as pl
from jax.experimental.pallas import tpu as pltpu


def _round_up(x, m):
    return -(-x // m) * m


def _mmoe_kernel(expert_num, expert_size, gate_num,
                 x_ref, w1_ref, b1_ref, rb_ref, wt_ref, bt_ref, wo_ref, bo_ref,
                 out_ref):
    """One batch tile of the MMoE forward.

    x_ref  : (TB, F)            bf16
    w1_ref : (F, P1)            bf16   fused [experts | gate logits | pad]
    b1_ref : (1, P1)            f32
    rb_ref : (expert_num, NE)   bf16   0/1 gate-broadcast matrix
    wt_ref : (gate_num, NE, T)  bf16   tower weights pre-tiled over experts
    bt_ref : (gate_num, 1, T)   f32
    wo_ref : (gate_num, T, 2)   bf16
    bo_ref : (gate_num, 1, 2)   f32
    out_ref: (TB, gate_num*2)   f32
    """
    ne = expert_num * expert_size

    x = x_ref[...]                                           # (TB, F) bf16
    # Single fused MXU matmul: experts + all gate logits in one 128-lane slab.
    h1 = jnp.dot(x, w1_ref[...],
                 preferred_element_type=jnp.float32) + b1_ref[...]  # (TB, P1) f32

    experts = jnp.maximum(h1[:, :ne], 0.0)                   # (TB, NE) f32
    rb = rb_ref[...]                                         # (expert_num, NE) bf16

    heads = []
    for g in range(gate_num):
        lo = ne + g * expert_num
        logits = h1[:, lo:lo + expert_num]                   # (TB, expert_num) f32
        logits = logits - jnp.max(logits, axis=1, keepdims=True)
        e = jnp.exp(logits)
        denom = jnp.sum(e, axis=1, keepdims=True)
        gate = e * pl.reciprocal(denom, approx=True)         # (TB, expert_num)

        # Broadcast gate across expert lanes with one tiny MXU matmul
        # (gate_rep[:, i*E + e] == gate[:, i]); avoids expert_num lane slices.
        gate_rep = jnp.dot(gate.astype(jnp.bfloat16), rb,
                           preferred_element_type=jnp.float32)       # (TB, NE)
        weighted = (experts * gate_rep).astype(jnp.bfloat16)         # (TB, NE)

        # Tower weight is pre-tiled over experts, so this dot computes
        # relu(sum_i gate_i * expert_i @ Wt + bt) without materializing the mix.
        tower = jnp.maximum(
            jnp.dot(weighted, wt_ref[g],
                    preferred_element_type=jnp.float32) + bt_ref[g], 0.0)  # (TB, T)
        head = jnp.dot(tower.astype(jnp.bfloat16), wo_ref[g],
                       preferred_element_type=jnp.float32) + bo_ref[g]     # (TB, 2)
        heads.append(head)

    out_ref[...] = jnp.concatenate(heads, axis=1)            # (TB, gate_num*2)


def _pack_params(params, *, feature_size, expert_num, expert_size, gate_num):
    """Pack the per-module PyTorch-style params into fused kernel operands."""
    we, be, wg, bg, wt, bt, wo, bo = params
    ne = expert_num * expert_size
    ng = gate_num * expert_num
    p1 = _round_up(ne + ng, 128)         # lane-dense fused width (zero padded)

    w_exp = jnp.transpose(we, (1, 0, 2)).reshape(feature_size, ne)   # (F, NE)
    w_gat = jnp.transpose(wg, (1, 0, 2)).reshape(feature_size, ng)   # (F, NG)
    w1 = jnp.zeros((feature_size, p1), jnp.float32)
    w1 = w1.at[:, :ne].set(w_exp).at[:, ne:ne + ng].set(w_gat)

    b1 = jnp.zeros((1, p1), jnp.float32)
    b1 = b1.at[:, :ne].set(be.reshape(1, ne)).at[:, ne:ne + ng].set(bg.reshape(1, ng))

    # 0/1 gate-broadcast matrix: rb[i, j] = 1 iff column j belongs to expert i.
    col_expert = jnp.arange(ne) // expert_size
    rb = (col_expert[None, :] == jnp.arange(expert_num)[:, None]).astype(jnp.bfloat16)

    wt_tiled = jnp.tile(wt, (1, expert_num, 1))              # (gate_num, NE, T)

    return (w1.astype(jnp.bfloat16), b1, rb,
            wt_tiled.astype(jnp.bfloat16), bt,
            wo.astype(jnp.bfloat16), bo)


def mmoe_forward(x, params, *, expert_num, expert_size, gate_num, tb=None):
    """Runs the fused Pallas MMoE forward; returns a list of (B, 2) outputs."""
    B, F = x.shape
    w1, b1, rb, wt_tiled, bt, wo, bo = _pack_params(
        params, feature_size=F, expert_num=expert_num,
        expert_size=expert_size, gate_num=gate_num)

    # Batch tile: as big as reasonable (weights are tiny & resident); pad B.
    if tb is None:
        tb = min(512, _round_up(B, 8))
    b_pad = _round_up(B, tb)
    x_p = x if b_pad == B else jnp.pad(x, ((0, b_pad - B), (0, 0)))
    x_bf = x_p.astype(jnp.bfloat16)

    out_w = gate_num * 2
    grid = (b_pad // tb,)

    def const_spec(shape):
        zeros = (0,) * len(shape)
        return pl.BlockSpec(shape, lambda b, _z=zeros: _z)

    kernel = functools.partial(_mmoe_kernel, expert_num, expert_size, gate_num)
    out = pl.pallas_call(
        kernel,
        out_shape=jax.ShapeDtypeStruct((b_pad, out_w), jnp.float32),
        grid=grid,
        in_specs=[
            pl.BlockSpec((tb, F), lambda b: (b, 0)),   # batch-tiled input
            const_spec(w1.shape), const_spec(b1.shape), const_spec(rb.shape),
            const_spec(wt_tiled.shape), const_spec(bt.shape),
            const_spec(wo.shape), const_spec(bo.shape),
        ],
        out_specs=pl.BlockSpec((tb, out_w), lambda b: (b, 0)),
        compiler_params=pltpu.CompilerParams(
            dimension_semantics=("parallel",),          # v7x: shard batch over 2 TCs
            vmem_limit_bytes=32 * 1024 * 1024),         # safe on v7x's 64 MiB VMEM
    )(x_bf, w1, b1, rb, wt_tiled, bt, wo, bo)

    out = out[:B]
    return [out[:, 2 * g:2 * (g + 1)] for g in range(gate_num)]


def init_params(key, feature_size, expert_num, expert_size, gate_num, tower_size):
    """Deterministic synthetic parameters (xavier-normal-ish weights, bias=0.1)."""
    ks = jax.random.split(key, 8)

    def xavier(k, shape):  # shape = (in, out)
        std = (2.0 / (shape[0] + shape[1])) ** 0.5
        return std * jax.random.normal(k, shape, dtype=jnp.float32)

    we = jnp.stack([xavier(k, (feature_size, expert_size))
                    for k in jax.random.split(ks[0], expert_num)])
    be = jnp.full((expert_num, 1, expert_size), 0.1, jnp.float32)
    wg = jnp.stack([xavier(k, (feature_size, expert_num))
                    for k in jax.random.split(ks[1], gate_num)])
    bg = jnp.full((gate_num, 1, expert_num), 0.1, jnp.float32)
    wt = jnp.stack([xavier(k, (expert_size, tower_size))
                    for k in jax.random.split(ks[2], gate_num)])
    bt = jnp.full((gate_num, 1, tower_size), 0.1, jnp.float32)
    wo = jnp.stack([xavier(k, (tower_size, 2))
                    for k in jax.random.split(ks[3], gate_num)])
    bo = jnp.full((gate_num, 1, 2), 0.1, jnp.float32)
    return we, be, wg, bg, wt, bt, wo, bo


def mmoe_reference(x, params, *, expert_num, gate_num):
    """Pure-JAX f32 reference mirroring the PyTorch forward exactly."""
    we, be, wg, bg, wt, bt, wo, bo = params
    experts = [jnp.maximum(x @ we[i] + be[i], 0.0) for i in range(expert_num)]
    expert_concat = jnp.stack(experts, axis=1)                 # (B, expert_num, E)
    outs = []
    for g in range(gate_num):
        gate = jax.nn.softmax(x @ wg[g] + bg[g], axis=1)       # (B, expert_num)
        mix = jnp.sum(expert_concat * gate[:, :, None], axis=1)  # (B, E)
        tower = jnp.maximum(mix @ wt[g] + bt[g], 0.0)
        outs.append(tower @ wo[g] + bo[g])
    return outs


if __name__ == "__main__":
    B, FEATURE, EXPERT_NUM, EXPERT_SIZE, GATE_NUM, TOWER_SIZE = 8, 32, 4, 16, 2, 8

    key = jax.random.PRNGKey(0)
    kx, kp = jax.random.split(key)
    x = jax.random.normal(kx, (B, FEATURE), dtype=jnp.float32)
    params = init_params(kp, FEATURE, EXPERT_NUM, EXPERT_SIZE, GATE_NUM, TOWER_SIZE)

    outs = mmoe_forward(x, params, expert_num=EXPERT_NUM,
                        expert_size=EXPERT_SIZE, gate_num=GATE_NUM)
    outs = [jax.block_until_ready(o) for o in outs]

    refs = mmoe_reference(x, params, expert_num=EXPERT_NUM, gate_num=GATE_NUM)
    # Tolerance is loosened vs the f32 reference because matmul operands are
    # bf16 (f32 accumulation) and the softmax reciprocal uses the EUP approx.
    for o, r in zip(outs, refs):
        assert o.shape == (B, 2)
        assert jnp.allclose(o, r, atol=1e-1, rtol=1e-1), "mismatch vs reference"

    print("KERNEL_OK")
</pallas_src>

<mosaic_0001>
module attributes {stable_mosaic.version = 11 : i64} {
  func.func @_mmoe_kernel(%arg0: i32, %arg1: memref<8x32xbf16, #tpu.memory_space<vmem>>, %arg2: memref<32x128xbf16, #tpu.memory_space<vmem>>, %arg3: memref<1x128xf32, #tpu.memory_space<vmem>>, %arg4: memref<4x64xbf16, #tpu.memory_space<vmem>>, %arg5: memref<2x64x8xbf16, #tpu.memory_space<vmem>>, %arg6: memref<2x1x8xf32, #tpu.memory_space<vmem>>, %arg7: memref<2x8x2xbf16, #tpu.memory_space<vmem>>, %arg8: memref<2x1x2xf32, #tpu.memory_space<vmem>>, %arg9: memref<8x4xf32, #tpu.memory_space<vmem>>) attributes {dimension_semantics = [#tpu.dimension_semantics<parallel>], iteration_bounds = array<i64: 1>, scalar_prefetch = 0 : i64, scratch_operands = 0 : i64, tpu.core_type = #tpu.core_type<tc>, window_params = [{transform_indices = @transform_0, window_bounds = array<i64: 8, 32>}, {pipeline_mode = #tpu.pipeline_mode<synchronous>, transform_indices = @transform_1, window_bounds = array<i64: 32, 128>}, {pipeline_mode = #tpu.pipeline_mode<synchronous>, transform_indices = @transform_2, window_bounds = array<i64: 1, 128>}, {pipeline_mode = #tpu.pipeline_mode<synchronous>, transform_indices = @transform_3, window_bounds = array<i64: 4, 64>}, {pipeline_mode = #tpu.pipeline_mode<synchronous>, transform_indices = @transform_4, window_bounds = array<i64: 2, 64, 8>}, {pipeline_mode = #tpu.pipeline_mode<synchronous>, transform_indices = @transform_5, window_bounds = array<i64: 2, 1, 8>}, {pipeline_mode = #tpu.pipeline_mode<synchronous>, transform_indices = @transform_6, window_bounds = array<i64: 2, 8, 2>}, {pipeline_mode = #tpu.pipeline_mode<synchronous>, transform_indices = @transform_7, window_bounds = array<i64: 2, 1, 2>}, {transform_indices = @transform_8, window_bounds = array<i64: 8, 4>}]} {
    %c0 = arith.constant 0 : index
    %c0_0 = arith.constant 0 : index
    %0 = vector.load %arg1[%c0, %c0_0] : memref<8x32xbf16, #tpu.memory_space<vmem>>, vector<8x32xbf16>
    %c0_1 = arith.constant 0 : index
    %c0_2 = arith.constant 0 : index
    %1 = vector.load %arg2[%c0_1, %c0_2] : memref<32x128xbf16, #tpu.memory_space<vmem>>, vector<32x128xbf16>
    %cst = arith.constant dense<0.000000e+00> : vector<8x128xf32>
    %2 = tpu.matmul %0, %1, %cst {dimension_numbers = #tpu.dot_dimension_numbers<[1], [0], [0], [1], [0, 0, 1, 1], [], []>} : vector<8x32xbf16>, vector<32x128xbf16>, vector<8x128xf32> -> vector<8x128xf32>
    %c0_3 = arith.constant 0 : index
    %c0_4 = arith.constant 0 : index
    %3 = vector.load %arg3[%c0_3, %c0_4] : memref<1x128xf32, #tpu.memory_space<vmem>>, vector<1x128xf32>
    %4 = vector.broadcast %3 : vector<1x128xf32> to vector<8x128xf32>
    %5 = arith.addf %2, %4 : vector<8x128xf32>
    %6 = vector.extract_strided_slice %5 {offsets = [0, 0], sizes = [8, 64], strides = [1, 1]} : vector<8x128xf32> to vector<8x64xf32>
    %cst_5 = arith.constant 0.000000e+00 : f32
    %7 = vector.broadcast %cst_5 : f32 to vector<8x64xf32>
    %8 = arith.maximumf %6, %7 : vector<8x64xf32>
    %c0_6 = arith.constant 0 : index
    %c0_7 = arith.constant 0 : index
    %9 = vector.load %arg4[%c0_6, %c0_7] : memref<4x64xbf16, #tpu.memory_space<vmem>>, vector<4x64xbf16>
    %10 = vector.extract_strided_slice %5 {offsets = [0, 64], sizes = [8, 4], strides = [1, 1]} : vector<8x128xf32> to vector<8x4xf32>
    %cst_8 = arith.constant dense<0xFF800000> : vector<8xf32>
    %11 = vector.multi_reduction <maximumf>, %10, %cst_8 [1] : vector<8x4xf32> to vector<8xf32>
    %12 = vector.shape_cast %11 : vector<8xf32> to vector<8x1xf32>
    %13 = vector.broadcast %12 : vector<8x1xf32> to vector<8x4xf32>
    %14 = arith.subf %10, %13 : vector<8x4xf32>
    %15 = math.exp %14 : vector<8x4xf32>
    %cst_9 = arith.constant dense<0.000000e+00> : vector<8xf32>
    %16 = vector.multi_reduction <add>, %15, %cst_9 [1] : vector<8x4xf32> to vector<8xf32>
    %17 = vector.shape_cast %16 : vector<8xf32> to vector<8x1xf32>
    %18 = tpu.reciprocal %17 {approx = true} : vector<8x1xf32> -> vector<8x1xf32>
    %19 = vector.broadcast %18 : vector<8x1xf32> to vector<8x4xf32>
    %20 = arith.mulf %15, %19 : vector<8x4xf32>
    %21 = arith.truncf %20 : vector<8x4xf32> to vector<8x4xbf16>
    %cst_10 = arith.constant dense<0.000000e+00> : vector<8x64xf32>
    %22 = tpu.matmul %21, %9, %cst_10 {dimension_numbers = #tpu.dot_dimension_numbers<[1], [0], [0], [1], [0, 0, 1, 1], [], []>} : vector<8x4xbf16>, vector<4x64xbf16>, vector<8x64xf32> -> vector<8x64xf32>
    %23 = arith.mulf %8, %22 : vector<8x64xf32>
    %24 = arith.truncf %23 : vector<8x64xf32> to vector<8x64xbf16>
    %c0_11 = arith.constant 0 : index
    %c0_12 = arith.constant 0 : index
    %c0_13 = arith.constant 0 : index
    %25 = vector.load %arg5[%c0_11, %c0_12, %c0_13] : memref<2x64x8xbf16, #tpu.memory_space<vmem>>, vector<1x64x8xbf16>
    %26 = vector.shape_cast %25 : vector<1x64x8xbf16> to vector<64x8xbf16>
    %cst_14 = arith.constant dense<0.000000e+00> : vector<8x8xf32>
    %27 = tpu.matmul %24, %26, %cst_14 {dimension_numbers = #tpu.dot_dimension_numbers<[1], [0], [0], [1], [0, 0, 1, 1], [], []>} : vector<8x64xbf16>, vector<64x8xbf16>, vector<8x8xf32> -> vector<8x8xf32>
    %c0_15 = arith.constant 0 : index
    %c0_16 = arith.constant 0 : index
    %c0_17 = arith.constant 0 : index
    %28 = vector.load %arg6[%c0_15, %c0_16, %c0_17] : memref<2x1x8xf32, #tpu.memory_space<vmem>>, vector<1x1x8xf32>
    %29 = vector.shape_cast %28 : vector<1x1x8xf32> to vector<1x8xf32>
    %30 = vector.broadcast %29 : vector<1x8xf32> to vector<8x8xf32>
    %31 = arith.addf %27, %30 : vector<8x8xf32>
    %cst_18 = arith.constant 0.000000e+00 : f32
    %32 = vector.broadcast %cst_18 : f32 to vector<8x8xf32>
    %33 = arith.maximumf %31, %32 : vector<8x8xf32>
    %34 = arith.truncf %33 : vector<8x8xf32> to vector<8x8xbf16>
    %c0_19 = arith.constant 0 : index
    %c0_20 = arith.constant 0 : index
    %c0_21 = arith.constant 0 : index
    %35 = vector.load %arg7[%c0_19, %c0_20, %c0_21] : memref<2x8x2xbf16, #tpu.memory_space<vmem>>, vector<1x8x2xbf16>
    %36 = vector.shape_cast %35 : vector<1x8x2xbf16> to vector<8x2xbf16>
    %cst_22 = arith.constant dense<0.000000e+00> : vector<8x2xf32>
    %37 = tpu.matmul %34, %36, %cst_22 {dimension_numbers = #tpu.dot_dimension_numbers<[1], [0], [0], [1], [0, 0, 1, 1], [], []>} : vector<8x8xbf16>, vector<8x2xbf16>, vector<8x2xf32> -> vector<8x2xf32>
    %c0_23 = arith.constant 0 : index
    %c0_24 = arith.constant 0 : index
    %c0_25 = arith.constant 0 : index
    %38 = vector.load %arg8[%c0_23, %c0_24, %c0_25] : memref<2x1x2xf32, #tpu.memory_space<vmem>>, vector<1x1x2xf32>
    %39 = vector.shape_cast %38 : vector<1x1x2xf32> to vector<1x2xf32>
    %40 = vector.broadcast %39 : vector<1x2xf32> to vector<8x2xf32>
    %41 = arith.addf %37, %40 : vector<8x2xf32>
    %42 = vector.extract_strided_slice %5 {offsets = [0, 68], sizes = [8, 4], strides = [1, 1]} : vector<8x128xf32> to vector<8x4xf32>
    %cst_26 = arith.constant dense<0xFF800000> : vector<8xf32>
    %43 = vector.multi_reduction <maximumf>, %42, %cst_26 [1] : vector<8x4xf32> to vector<8xf32>
    %44 = vector.shape_cast %43 : vector<8xf32> to vector<8x1xf32>
    %45 = vector.broadcast %44 : vector<8x1xf32> to vector<8x4xf32>
    %46 = arith.subf %42, %45 : vector<8x4xf32>
    %47 = math.exp %46 : vector<8x4xf32>
    %cst_27 = arith.constant dense<0.000000e+00> : vector<8xf32>
    %48 = vector.multi_reduction <add>, %47, %cst_27 [1] : vector<8x4xf32> to vector<8xf32>
    %49 = vector.shape_cast %48 : vector<8xf32> to vector<8x1xf32>
    %50 = tpu.reciprocal %49 {approx = true} : vector<8x1xf32> -> vector<8x1xf32>
    %51 = vector.broadcast %50 : vector<8x1xf32> to vector<8x4xf32>
    %52 = arith.mulf %47, %51 : vector<8x4xf32>
    %53 = arith.truncf %52 : vector<8x4xf32> to vector<8x4xbf16>
    %cst_28 = arith.constant dense<0.000000e+00> : vector<8x64xf32>
    %54 = tpu.matmul %53, %9, %cst_28 {dimension_numbers = #tpu.dot_dimension_numbers<[1], [0], [0], [1], [0, 0, 1, 1], [], []>} : vector<8x4xbf16>, vector<4x64xbf16>, vector<8x64xf32> -> vector<8x64xf32>
    %55 = arith.mulf %8, %54 : vector<8x64xf32>
    %56 = arith.truncf %55 : vector<8x64xf32> to vector<8x64xbf16>
    %c1 = arith.constant 1 : index
    %c0_29 = arith.constant 0 : index
    %c0_30 = arith.constant 0 : index
    %57 = vector.load %arg5[%c1, %c0_29, %c0_30] : memref<2x64x8xbf16, #tpu.memory_space<vmem>>, vector<1x64x8xbf16>
    %58 = vector.shape_cast %57 : vector<1x64x8xbf16> to vector<64x8xbf16>
    %cst_31 = arith.constant dense<0.000000e+00> : vector<8x8xf32>
    %59 = tpu.matmul %56, %58, %cst_31 {dimension_numbers = #tpu.dot_dimension_numbers<[1], [0], [0], [1], [0, 0, 1, 1], [], []>} : vector<8x64xbf16>, vector<64x8xbf16>, vector<8x8xf32> -> vector<8x8xf32>
    %c1_32 = arith.constant 1 : index
    %c0_33 = arith.constant 0 : index
    %c0_34 = arith.constant 0 : index
    %60 = vector.load %arg6[%c1_32, %c0_33, %c0_34] : memref<2x1x8xf32, #tpu.memory_space<vmem>>, vector<1x1x8xf32>
    %61 = vector.shape_cast %60 : vector<1x1x8xf32> to vector<1x8xf32>
    %62 = vector.broadcast %61 : vector<1x8xf32> to vector<8x8xf32>
    %63 = arith.addf %59, %62 : vector<8x8xf32>
    %cst_35 = arith.constant 0.000000e+00 : f32
    %64 = vector.broadcast %cst_35 : f32 to vector<8x8xf32>
    %65 = arith.maximumf %63, %64 : vector<8x8xf32>
    %66 = arith.truncf %65 : vector<8x8xf32> to vector<8x8xbf16>
    %c1_36 = arith.constant 1 : index
    %c0_37 = arith.constant 0 : index
    %c0_38 = arith.constant 0 : index
    %67 = vector.load %arg7[%c1_36, %c0_37, %c0_38] : memref<2x8x2xbf16, #tpu.memory_space<vmem>>, vector<1x8x2xbf16>
    %68 = vector.shape_cast %67 : vector<1x8x2xbf16> to vector<8x2xbf16>
    %cst_39 = arith.constant dense<0.000000e+00> : vector<8x2xf32>
    %69 = tpu.matmul %66, %68, %cst_39 {dimension_numbers = #tpu.dot_dimension_numbers<[1], [0], [0], [1], [0, 0, 1, 1], [], []>} : vector<8x8xbf16>, vector<8x2xbf16>, vector<8x2xf32> -> vector<8x2xf32>
    %c1_40 = arith.constant 1 : index
    %c0_41 = arith.constant 0 : index
    %c0_42 = arith.constant 0 : index
    %70 = vector.load %arg8[%c1_40, %c0_41, %c0_42] : memref<2x1x2xf32, #tpu.memory_space<vmem>>, vector<1x1x2xf32>
    %71 = vector.shape_cast %70 : vector<1x1x2xf32> to vector<1x2xf32>
    %72 = vector.broadcast %71 : vector<1x2xf32> to vector<8x2xf32>
    %73 = arith.addf %69, %72 : vector<8x2xf32>
    %74 = tpu.concatenate %41, %73 in 1 : vector<8x2xf32>, vector<8x2xf32> -> vector<8x4xf32>
    %c0_43 = arith.constant 0 : index
    %c0_44 = arith.constant 0 : index
    %75 = vector.load %arg9[%c0_43, %c0_44] : memref<8x4xf32, #tpu.memory_space<vmem>>, vector<8x4xf32>
    tpu.vector_store %arg9[%c0_43, %c0_44], %74 {strides = array<i32>} : memref<8x4xf32, #tpu.memory_space<vmem>>, vector<8x4xf32>,
    return
  }
  func.func @transform_0(%arg0: i32) -> (i32, i32) {
    %c0_i32 = arith.constant 0 : i32
    %c0_i32_0 = arith.constant 0 : i32
    return %arg0, %c0_i32 : i32, i32
  }
  func.func @transform_1(%arg0: i32) -> (i32, i32) {
    %c0_i32 = arith.constant 0 : i32
    %c0_i32_0 = arith.constant 0 : i32
    %c0_i32_1 = arith.constant 0 : i32
    return %c0_i32, %c0_i32_0 : i32, i32
  }
  func.func @transform_2(%arg0: i32) -> (i32, i32) {
    %c0_i32 = arith.constant 0 : i32
    %c0_i32_0 = arith.constant 0 : i32
    %c0_i32_1 = arith.constant 0 : i32
    return %c0_i32, %c0_i32_0 : i32, i32
  }
  func.func @transform_3(%arg0: i32) -> (i32, i32) {
    %c0_i32 = arith.constant 0 : i32
    %c0_i32_0 = arith.constant 0 : i32
    %c0_i32_1 = arith.constant 0 : i32
    return %c0_i32, %c0_i32_0 : i32, i32
  }
  func.func @transform_4(%arg0: i32) -> (i32, i32, i32) {
    %c0_i32 = arith.constant 0 : i32
    %c0_i32_0 = arith.constant 0 : i32
    %c0_i32_1 = arith.constant 0 : i32
    %c0_i32_2 = arith.constant 0 : i32
    return %c0_i32, %c0_i32_0, %c0_i32_1 : i32, i32, i32
  }
  func.func @transform_5(%arg0: i32) -> (i32, i32, i32) {
    %c0_i32 = arith.constant 0 : i32
    %c0_i32_0 = arith.constant 0 : i32
    %c0_i32_1 = arith.constant 0 : i32
    %c0_i32_2 = arith.constant 0 : i32
    return %c0_i32, %c0_i32_0, %c0_i32_1 : i32, i32, i32
  }
  func.func @transform_6(%arg0: i32) -> (i32, i32, i32) {
    %c0_i32 = arith.constant 0 : i32
    %c0_i32_0 = arith.constant 0 : i32
    %c0_i32_1 = arith.constant 0 : i32
    %c0_i32_2 = arith.constant 0 : i32
    return %c0_i32, %c0_i32_0, %c0_i32_1 : i32, i32, i32
  }
  func.func @transform_7(%arg0: i32) -> (i32, i32, i32) {
    %c0_i32 = arith.constant 0 : i32
    %c0_i32_0 = arith.constant 0 : i32
    %c0_i32_1 = arith.constant 0 : i32
    %c0_i32_2 = arith.constant 0 : i32
    return %c0_i32, %c0_i32_0, %c0_i32_1 : i32, i32, i32
  }
  func.func @transform_8(%arg0: i32) -> (i32, i32) {
    %c0_i32 = arith.constant 0 : i32
    %c0_i32_0 = arith.constant 0 : i32
    return %arg0, %c0_i32 : i32, i32
  }
}

</mosaic_0001>

<llo_original>
// kernel: tpu_custom_call.1
$region0: #{tpu_custom_call.1}
  #allocation0 [shape = 'u32[]', space=smem, size = 0x4, offset = 0x4, fixed_abs, tag = 'smem constant byte address 0x4 - core index']
  #allocation1 [shape = 'u32[72,128]{1,0:T(1,128)}', space=vmem, size = 0x9000, scoped, tag = 'internal scratch']
  %s0 = inlined_call_operand.vmem [shape: bf16[8,32], index: 0, kind: input, shape index: {}]
  %s1 = inlined_call_operand.vmem [shape: bf16[32,128], index: 1, kind: input, shape index: {}]
  %s2 = inlined_call_operand.vmem [shape: f32[1,128], index: 2, kind: input, shape index: {}]
  %s3 = inlined_call_operand.vmem [shape: bf16[4,64], index: 3, kind: input, shape index: {}]
  %s4 = inlined_call_operand.vmem [shape: bf16[2,64,8], index: 4, kind: input, shape index: {}]
  %s5 = inlined_call_operand.vmem [shape: f32[2,1,8], index: 5, kind: input, shape index: {}]
  %s6 = inlined_call_operand.vmem [shape: bf16[2,8,2], index: 6, kind: input, shape index: {}]
  %s7 = inlined_call_operand.vmem [shape: f32[2,1,2], index: 7, kind: input, shape index: {}]
  %s8 = inlined_call_operand.vmem [shape: f32[8,4], index: 8, kind: output, shape index: {}]
  %s9 = sld [smem:[#allocation0]]
  $region42: #{tpu_custom_call.1} parent=0
    _
  %s11 = ssub.s32 1, %s9
  %s12 = scalar_select 0, %s11, %s9
  // Predicated region
  $region2: #{tpu_custom_call.1} parent=0 // pred_check
    _
  $region3: #{tpu_custom_call.1} parent=0 // pred_check_branch
    %14 = sbr.rel (0) target = $region5
  $region4: #{tpu_custom_call.1} parent=0 // pred_region
    _
  $region5: #{tpu_custom_call.1} parent=0 // pred_fallthru
    _
  // Predicated region
  $region6: #{tpu_custom_call.1} parent=0 // pred_check
    _
  $region7: #{tpu_custom_call.1} parent=0 // pred_check_branch
    %16 = sbr.rel (0) target = $region9
  $region8: #{tpu_custom_call.1} parent=0 // pred_region
    _
  $region9: #{tpu_custom_call.1} parent=0 // pred_fallthru
    _
  // Predicated region
  $region10: #{tpu_custom_call.1} parent=0 // pred_check
    _
  $region11: #{tpu_custom_call.1} parent=0 // pred_check_branch
    %18 = sbr.rel (0) target = $region13
  $region12: #{tpu_custom_call.1} parent=0 // pred_region
    _
  $region13: #{tpu_custom_call.1} parent=0 // pred_fallthru
    _
  // Predicated region
  $region14: #{tpu_custom_call.1} parent=0 // pred_check
    _
  $region15: #{tpu_custom_call.1} parent=0 // pred_check_branch
    %20 = sbr.rel (0) target = $region17
  $region16: #{tpu_custom_call.1} parent=0 // pred_region
    _
  $region17: #{tpu_custom_call.1} parent=0 // pred_fallthru
    _
  // Predicated region
  $region18: #{tpu_custom_call.1} parent=0 // pred_check
    _
  $region19: #{tpu_custom_call.1} parent=0 // pred_check_branch
    %22 = sbr.rel (0) target = $region21
  $region20: #{tpu_custom_call.1} parent=0 // pred_region
    _
  $region21: #{tpu_custom_call.1} parent=0 // pred_fallthru
    _
  // Predicated region
  $region22: #{tpu_custom_call.1} parent=0 // pred_check
    _
  $region23: #{tpu_custom_call.1} parent=0 // pred_check_branch
    %24 = sbr.rel (0) target = $region25
  $region24: #{tpu_custom_call.1} parent=0 // pred_region
    _
  $region25: #{tpu_custom_call.1} parent=0 // pred_fallthru
    _
  // Predicated region
  $region26: #{tpu_custom_call.1} parent=0 // pred_check
    _
  $region27: #{tpu_custom_call.1} parent=0 // pred_check_branch
    %26 = sbr.rel (0) target = $region29
  $region28: #{tpu_custom_call.1} parent=0 // pred_region
    _
  $region29: #{tpu_custom_call.1} parent=0 // pred_fallthru
    _
  // Predicated region
  $region30: #{tpu_custom_call.1} parent=0 // pred_check
    _
  $region31: #{tpu_custom_call.1} parent=0 // pred_check_branch
    %28 = sbr.rel (0) target = $region33
  $region32: #{tpu_custom_call.1} parent=0 // pred_region
    _
  $region33: #{tpu_custom_call.1} parent=0 // pred_fallthru
    _
  %v30 = vld [vmem:[%s0] sm:$0xf]
  %v31 = vld [vmem:[%s1] sm:$0xf]
  %v32 = vld [vmem:[%s1 + $0x4] sm:$0xf]
  %v33 = vld [vmem:[%s1 + $0x8] sm:$0xf]
  %v34 = vld [vmem:[%s1 + $0xc] sm:$0xf]
  %v35 = vld [vmem:[%s2] sm:$0x1]
  %v37 = vperm.slane %v35, 0
  %v43 = vunpack.c.l.b16 %v31
  %v44 = vunpack.c.l.b16 %v32
  %v45 = vunpack.c.l.b16 %v33
  %v46 = vunpack.c.l.b16 %v34
  %v47 = vpack.c.b16 %v44, %v43
  %v48 = vpack.c.b16 %v46, %v45
  %vm51 = vcmask 261120
  %v53 = vsel %vm51, %v30, 0
  %55 = vmatpush.bf16.msra.mxu0 0
  %56 = vmatpush.bf16.msra.mxu0 0
  %57 = vmatpush.bf16.msra.mxu0 0
  %58 = vmatpush.bf16.msra.mxu0 0
  %59 = vmatpush.bf16.msra.mxu0 0
  %60 = vmatpush.bf16.msra.mxu0 0
  %61 = vmatpush.bf16.msra.mxu0 %v48
  %62 = vmatpush.bf16.msra.mxu0 %v47
  %63 = vmatmul.bf16.gmra.mxu0 %v53
  %v64 = vpop.f32.mrf.mxu0
  %v65 = vadd.f32 %v37, %v64
  %v66 = vpop.f32.mrf.mxu0
  %67 = vdwg.mxu0
  %v68 = vmax.f32 %v65, 0.0
  %v69 = vld [vmem:[%s3] sm:$0x3]
  %vm70 = vcmask 556544
  %v71 = vsel %vm70, %v65, -inf
  %72 = vmax.xlane.f32.xlu0 %v71
  %v73 = vpop.xlane.xlu0 %72
  %v74 = vsub.f32 %v65, %v73
  %v75 = vmul.f32 %v74, 1.442695
  %v76 = vpow.pop %v75
  %78 = vrot.lane.b32.xlu0 %v76, 64
  %v79 = vpop.permute.xlu0 %78
  %vm81 = vcmask 31744
  %v82 = vsel %vm81, %v79, 0.0
  %83 = vadd.xlane.f32.xlu0 %v82
  %v84 = vpop.xlane.xlu0 %83
  %v85 = vrcp.pop %v84
  %v86 = vmul.f32 %v76, %v85
  %v87 = vpack.c.bf16 %v86, %v86
  %89 = vrot.lane.b32.xlu0 %v87, 64
  %v90 = vpop.permute.xlu0 %89
  %v92 = vsel %vm81, %v90, 0
  %vm94 = vcmask 1041408
  %v96 = vsel %vm94, %v69, 0
  %98 = vmatpush.bf16.msra.mxu0 0
  %99 = vmatpush.bf16.msra.mxu0 0
  %100 = vmatpush.bf16.msra.mxu0 0
  %101 = vmatpush.bf16.msra.mxu0 0
  %102 = vmatpush.bf16.msra.mxu0 0
  %103 = vmatpush.bf16.msra.mxu0 0
  %104 = vmatpush.bf16.msra.mxu0 0
  %105 = vmatpush.bf16.msra.mxu0 %v96
  %106 = vmatmul.bf16.gmra.mxu0 %v92
  %v107 = vpop.f32.mrf.mxu0
  %v108 = vadd.f32 0.0, %v107
  %v109 = vpop.f32.mrf.mxu0
  %110 = vdwg.mxu0
  %v111 = vmul.f32 %v68, %v108
  %v112 = vpack.c.bf16 %v111, %v111
  %v113 = vld [vmem:[%s4] sm:$0xf]
  %v114 = vld [vmem:[%s4 + $0x4] sm:$0xf]
  %v115 = vld [vmem:[%s4 + $0x8] sm:$0xf]
  %v116 = vld [vmem:[%s4 + $0xc] sm:$0xf]
  %v117 = vld [vmem:[%s4 + $0x10] sm:$0xf]
  %v118 = vld [vmem:[%s4 + $0x14] sm:$0xf]
  %v119 = vld [vmem:[%s4 + $0x18] sm:$0xf]
  %v120 = vld [vmem:[%s4 + $0x1c] sm:$0xf]
  %v121 = vld [vmem:[%s5] sm:$0x1]
  %v123 = vperm.slane %v121, 0
  %v133 = vunpack.c.l.b16 %v113
  %v134 = vunpack.c.l.b16 %v114
  %v135 = vunpack.c.l.b16 %v115
  %v136 = vunpack.c.l.b16 %v116
  %v137 = vunpack.c.l.b16 %v117
  %v138 = vunpack.c.l.b16 %v118
  %v139 = vunpack.c.l.b16 %v119
  %v140 = vunpack.c.l.b16 %v120
  %v141 = vpack.c.b16 %v134, %v133
  %v142 = vpack.c.b16 %v136, %v135
  %v143 = vpack.c.b16 %v138, %v137
  %v144 = vpack.c.b16 %v140, %v139
  %vm149 = vcmask 523264
  %v151 = vsel %vm149, %v112, 0
  %153 = vmatpush.bf16.msra.mxu0 0
  %154 = vmatpush.bf16.msra.mxu0 0
  %155 = vmatpush.bf16.msra.mxu0 0
  %156 = vmatpush.bf16.msra.mxu0 0
  %157 = vmatpush.bf16.msra.mxu0 %v144
  %158 = vmatpush.bf16.msra.mxu0 %v143
  %159 = vmatpush.bf16.msra.mxu0 %v142
  %160 = vmatpush.bf16.msra.mxu0 %v141
  %161 = vmatmul.bf16.gmra.mxu0 %v151
  %v162 = vpop.f32.mrf.mxu0
  %v163 = vadd.f32 %v123, %v162
  %v164 = vpop.f32.mrf.mxu0
  %165 = vdwg.mxu0
  %v166 = vmax.f32 %v163, 0.0
  %v167 = vpack.c.bf16 %v166, %v166
  %v168 = vld [vmem:[%s6] sm:$0xf]
  %v169 = vld [vmem:[%s7] sm:$0x1]
  %v171 = vperm.slane %v169, 0
  %vm173 = vcmask 64512
  %v175 = vsel %vm173, %v167, 0
  %vm177 = vcmask 1043456
  %v179 = vsel %vm177, %v168, 0
  %181 = vmatpush.bf16.msra.mxu0 0
  %182 = vmatpush.bf16.msra.mxu0 0
  %183 = vmatpush.bf16.msra.mxu0 0
  %184 = vmatpush.bf16.msra.mxu0 0
  %185 = vmatpush.bf16.msra.mxu0 0
  %186 = vmatpush.bf16.msra.mxu0 0
  %187 = vmatpush.bf16.msra.mxu0 0
  %188 = vmatpush.bf16.msra.mxu0 %v179
  %189 = vmatmul.bf16.gmra.mxu0 %v175
  %v190 = vpop.f32.mrf.mxu0
  %v191 = vadd.f32 %v171, %v190
  %v192 = vpop.f32.mrf.mxu0
  %193 = vdwg.mxu0
  %vm194 = vcmask 589344
  %v195 = vsel %vm194, %v65, -inf
  %196 = vmax.xlane.f32.xlu0 %v195
  %v197 = vpop.xlane.xlu0 %196
  %v198 = vsub.f32 %v65, %v197
  %v199 = vmul.f32 %v198, 1.442695
  %v200 = vpow.pop %v199
  %202 = vrot.lane.b32.xlu0 %v200, 60
  %v203 = vpop.permute.xlu0 %202
  %v205 = vsel %vm81, %v203, 0.0
  %206 = vadd.xlane.f32.xlu0 %v205
  %v207 = vpop.xlane.xlu0 %206
  %v208 = vrcp.pop %v207
  %v209 = vmul.f32 %v200, %v208
  %v210 = vpack.c.bf16 %v209, %v209
  %212 = vrot.lane.b32.xlu0 %v210, 60
  %v213 = vpop.permute.xlu0 %212
  %v215 = vsel %vm81, %v213, 0
  %217 = vmatpush.bf16.msra.mxu0 0
  %218 = vmatpush.bf16.msra.mxu0 0
  %219 = vmatpush.bf16.msra.mxu0 0
  %220 = vmatpush.bf16.msra.mxu0 0
  %221 = vmatpush.bf16.msra.mxu0 0
  %222 = vmatpush.bf16.msra.mxu0 0
  %223 = vmatpush.bf16.msra.mxu0 0
  %224 = vmatpush.bf16.msra.mxu0 %v96
  %225 = vmatmul.bf16.gmra.mxu0 %v215
  %v226 = vpop.f32.mrf.mxu0
  %v227 = vadd.f32 0.0, %v226
  %v228 = vpop.f32.mrf.mxu0
  %229 = vdwg.mxu0
  %v230 = vmul.f32 %v68, %v227
  %v231 = vpack.c.bf16 %v230, %v230
  %s232 = scalar_lea.vmem %s4, 32
  %v233 = vld [vmem:[%s232] sm:$0xf]
  %v234 = vld [vmem:[%s232 + $0x4] sm:$0xf]
  %v235 = vld [vmem:[%s232 + $0x8] sm:$0xf]
  %v236 = vld [vmem:[%s232 + $0xc] sm:$0xf]
  %v237 = vld [vmem:[%s232 + $0x10] sm:$0xf]
  %v238 = vld [vmem:[%s232 + $0x14] sm:$0xf]
  %v239 = vld [vmem:[%s232 + $0x18] sm:$0xf]
  %v240 = vld [vmem:[%s232 + $0x1c] sm:$0xf]
  %s241 = scalar_lea.vmem %s5, 1
  %v242 = vld [vmem:[%s241] sm:$0x1]
  %v244 = vperm.slane %v242, 0
  %v254 = vunpack.c.l.b16 %v233
  %v255 = vunpack.c.l.b16 %v234
  %v256 = vunpack.c.l.b16 %v235
  %v257 = vunpack.c.l.b16 %v236
  %v258 = vunpack.c.l.b16 %v237
  %v259 = vunpack.c.l.b16 %v238
  %v260 = vunpack.c.l.b16 %v239
  %v261 = vunpack.c.l.b16 %v240
  %v262 = vpack.c.b16 %v255, %v254
  %v263 = vpack.c.b16 %v257, %v256
  %v264 = vpack.c.b16 %v259, %v258
  %v265 = vpack.c.b16 %v261, %v260
  %v271 = vsel %vm149, %v231, 0
  %273 = vmatpush.bf16.msra.mxu0 0
  %274 = vmatpush.bf16.msra.mxu0 0
  %275 = vmatpush.bf16.msra.mxu0 0
  %276 = vmatpush.bf16.msra.mxu0 0
  %277 = vmatpush.bf16.msra.mxu0 %v265
  %278 = vmatpush.bf16.msra.mxu0 %v264
  %279 = vmatpush.bf16.msra.mxu0 %v263
  %280 = vmatpush.bf16.msra.mxu0 %v262
  %281 = vmatmul.bf16.gmra.mxu0 %v271
  %v282 = vpop.f32.mrf.mxu0
  %v283 = vadd.f32 %v244, %v282
  %v284 = vpop.f32.mrf.mxu0
  %285 = vdwg.mxu0
  %v286 = vmax.f32 %v283, 0.0
  %v287 = vpack.c.bf16 %v286, %v286
  %s288 = scalar_lea.vmem %s6, 4
  %v289 = vld [vmem:[%s288] sm:$0xf]
  %s290 = scalar_lea.vmem %s7, 1
  %v291 = vld [vmem:[%s290] sm:$0x1]
  %v293 = vperm.slane %v291, 0
  %v296 = vsel %vm173, %v287, 0
  %v299 = vsel %vm177, %v289, 0
  %301 = vmatpush.bf16.msra.mxu0 0
  %302 = vmatpush.bf16.msra.mxu0 0
  %303 = vmatpush.bf16.msra.mxu0 0
  %304 = vmatpush.bf16.msra.mxu0 0
  %305 = vmatpush.bf16.msra.mxu0 0
  %306 = vmatpush.bf16.msra.mxu0 0
  %307 = vmatpush.bf16.msra.mxu0 0
  %308 = vmatpush.bf16.msra.mxu0 %v299
  %309 = vmatmul.bf16.gmra.mxu0 %v296
  %v310 = vpop.f32.mrf.mxu0
  %v311 = vadd.f32 %v293, %v310
  %v312 = vpop.f32.mrf.mxu0
  %313 = vdwg.mxu0
  %315 = vrot.lane.b32.xlu0 %v311, 2
  %v316 = vpop.permute.xlu0 %315
  %vm318 = vcmask 15360
  %v319 = vsel %vm318, %v191, %v316
  %320 = vst.msk [vmem:[%s8] sm:$0xff] %vm81, %v319
  // Predicated region
  $region34: #{tpu_custom_call.1} parent=0 // pred_check
    _
  $region35: #{tpu_custom_call.1} parent=0 // pred_check_branch
    %322 = sbr.rel (0) target = $region37
  $region36: #{tpu_custom_call.1} parent=0 // pred_region
    _
  $region37: #{tpu_custom_call.1} parent=0 // pred_fallthru
    _
  // Predicated region
  $region38: #{tpu_custom_call.1} parent=0 // pred_check
    _
  $region39: #{tpu_custom_call.1} parent=0 // pred_check_branch
    %324 = sbr.rel (0) target = $region41
  $region40: #{tpu_custom_call.1} parent=0 // pred_region
    _
  $region41: #{tpu_custom_call.1} parent=0 // pred_fallthru
    _

</llo_original>
